<compile_context>
chip_gen: v7x
topology: tpu7x:2x2x1
jax: 0.10.0
libtpu: 0.0.40
codegen_flags: <defaults>
</compile_context>

<pallas_src>
import jax
import jax.numpy as jnp
from jax.experimental import pallas as pl
from jax.experimental.pallas import tpu as pltpu


# ----------------------------- config ----------------------------------------
class LlamaConfig:
    dim = 128
    multiple_of = 4
    ffn_dim_multiplier = None


def mlp_hidden_dim(cfg):
    hidden = 4 * cfg.dim
    hidden = int(2 * hidden / 3)
    if cfg.ffn_dim_multiplier is not None:
        hidden = int(hidden * cfg.ffn_dim_multiplier)
    # verbatim reproduction of the module's formula
    # TODO(synk): upstream uses `hidden * multiple_of - 1` (not the usual round-up
    #             `hidden + multiple_of - 1`); reproduced exactly as written.
    hidden = cfg.multiple_of * ((hidden * cfg.multiple_of - 1) // cfg.multiple_of)
    return hidden


def _round_up(a, b):
    return (a + b - 1) // b * b


def _silu(g):
    # f32 elementwise; exp lowers to the EUP slot.
    return g * (1.0 / (1.0 + jnp.exp(-g)))


# ----------------------------- kernel -----------------------------------------
def llama_mlp_kernel(x_ref, w1_ref, w3_ref, w2_ref, o_ref, acc_ref):
    """One (row-block i, hidden-block k) grid step of the fused SwiGLU MLP."""
    k = pl.program_id(1)                       # hidden-dim reduction step (last grid axis)

    @pl.when(k == 0)
    def _init():
        acc_ref[...] = jnp.zeros_like(acc_ref)

    x = x_ref[...]                                                       # (bm, dp)  bf16
    # up-projections on the MXU, f32 accumulation
    g = jnp.dot(x, w1_ref[...], preferred_element_type=jnp.float32)     # (bm, bh) f32
    u = jnp.dot(x, w3_ref[...], preferred_element_type=jnp.float32)     # (bm, bh) f32
    # SwiGLU gate in f32 (VPU + EUP)
    h = _silu(g) * u
    # partial down-projection for this hidden slice, accumulated in f32
    acc_ref[...] += jnp.dot(h.astype(w2_ref.dtype), w2_ref[...],
                            preferred_element_type=jnp.float32)

    @pl.when(k == pl.num_programs(1) - 1)
    def _finalize():
        o_ref[...] = acc_ref[...].astype(o_ref.dtype)


# ----------------------------- wrappers ----------------------------------------
def prepare_weights(w1, w2, w3, *, block_h=128):
    """Pad / transpose / bf16-cast the torch-layout Linear weights ONCE.

    torch layouts: weight_1/weight_3: (hidden, dim); weight_2: (dim, hidden).
    Stored here as x-matmul-ready (dim_p, hidden_p) / (hidden_p, dim_p) bf16 arrays.
    """
    assert block_h % 128 == 0, "hidden tile must be lane-aligned"
    hidden, dim = w1.shape
    assert w3.shape == (hidden, dim) and w2.shape == (dim, hidden)

    dp = _round_up(dim, 128)
    hp = _round_up(hidden, block_h)

    w1p = jnp.zeros((dp, hp), jnp.float32).at[:dim, :hidden].set(w1.T).astype(jnp.bfloat16)
    w3p = jnp.zeros((dp, hp), jnp.float32).at[:dim, :hidden].set(w3.T).astype(jnp.bfloat16)
    w2p = jnp.zeros((hp, dp), jnp.float32).at[:hidden, :dim].set(w2.T).astype(jnp.bfloat16)

    return dict(w1=w1p, w3=w3p, w2=w2p, dim=dim, hidden=hidden,
                dp=dp, hp=hp, block_h=block_h)


def llama_mlp(x, prepped, *, block_m=256, interpret=False):
    """x: (..., dim) float32 -> float32 of the same shape (torch LlamaMLP.forward)."""
    dim, dp = prepped["dim"], prepped["dp"]
    hp, bh = prepped["hp"], prepped["block_h"]
    assert x.shape[-1] == dim

    orig_shape = x.shape
    xm = x.reshape(-1, dim).astype(jnp.float32)
    M = xm.shape[0]

    bm = _round_up(min(block_m, M), 8)
    mp = _round_up(M, bm)

    # zero-pad rows (sublanes) and features (lanes); cast operands to bf16 for the MXU
    xp = jnp.zeros((mp, dp), jnp.float32).at[:M, :dim].set(xm).astype(jnp.bfloat16)

    grid = (mp // bm, hp // bh)

    out = pl.pallas_call(
        llama_mlp_kernel,
        out_shape=jax.ShapeDtypeStruct((mp, dp), jnp.float32),
        grid_spec=pltpu.PrefetchScalarGridSpec(
            num_scalar_prefetch=0,
            grid=grid,
            in_specs=[
                pl.BlockSpec((bm, dp), lambda i, k: (i, 0)),   # x row block (reused over k)
                pl.BlockSpec((dp, bh), lambda i, k: (0, k)),   # w1 hidden slice
                pl.BlockSpec((dp, bh), lambda i, k: (0, k)),   # w3 hidden slice
                pl.BlockSpec((bh, dp), lambda i, k: (k, 0)),   # w2 hidden slice
            ],
            out_specs=pl.BlockSpec((bm, dp), lambda i, k: (i, 0)),   # VMEM-resident over k
            scratch_shapes=[pltpu.VMEM((bm, dp), jnp.float32)],      # f32 accumulator
        ),
        compiler_params=pltpu.CompilerParams(
            dimension_semantics=("parallel", "arbitrary")),
        interpret=interpret,
    )(xp, prepped["w1"], prepped["w3"], prepped["w2"])

    return out[:M, :dim].reshape(orig_shape)


# ----------------------------- main --------------------------------------------
if __name__ == "__main__":
    cfg = LlamaConfig()
    hidden = mlp_hidden_dim(cfg)           # 1360 for dim=128, multiple_of=4

    key = jax.random.PRNGKey(0)
    kx, k1, k2, k3 = jax.random.split(key, 4)
    batch, seq = 2, 8
    x = jax.random.normal(kx, (batch, seq, cfg.dim), jnp.float32)
    # torch nn.Linear weight layouts
    w1 = 0.05 * jax.random.normal(k1, (hidden, cfg.dim), jnp.float32)   # weight_1.weight
    w2 = 0.05 * jax.random.normal(k2, (cfg.dim, hidden), jnp.float32)   # weight_2.weight
    w3 = 0.05 * jax.random.normal(k3, (hidden, cfg.dim), jnp.float32)   # weight_3.weight

    prepped = prepare_weights(w1, w2, w3, block_h=128)
    y = llama_mlp(x, prepped)
    y = jax.block_until_ready(y)
    assert y.shape == x.shape and y.dtype == jnp.float32
    assert bool(jnp.all(jnp.isfinite(y)))

    # reference #1: same mixed precision (bf16 operands, f32 accumulate / elementwise)
    w1b, w2b, w3b = (w.astype(jnp.bfloat16).astype(jnp.float32) for w in (w1, w2, w3))
    xb = x.astype(jnp.bfloat16).astype(jnp.float32)
    g = xb @ w1b.T
    u = xb @ w3b.T
    h = _silu(g) * u
    ref_mixed = h.astype(jnp.bfloat16).astype(jnp.float32) @ w2b.T
    assert bool(jnp.allclose(y, ref_mixed, atol=2e-3, rtol=2e-3)), \
        f"mixed-precision ref mismatch: {float(jnp.max(jnp.abs(y - ref_mixed)))}"

    # reference #2: full-f32 torch-equivalent semantics (looser tolerance for bf16 weights)
    g32 = x @ w1.T
    ref_f32 = (_silu(g32) * (x @ w3.T)) @ w2.T
    assert bool(jnp.allclose(y, ref_f32, atol=3e-2, rtol=3e-2)), \
        f"f32 ref mismatch: {float(jnp.max(jnp.abs(y - ref_f32)))}"

    print("KERNEL_OK")
</pallas_src>

<mosaic_0001>
module attributes {stable_mosaic.version = 11 : i64} {
  func.func @llama_mlp_kernel(%arg0: i32, %arg1: i32, %arg2: memref<16x128xbf16, #tpu.memory_space<vmem>>, %arg3: memref<128x128xbf16, #tpu.memory_space<vmem>>, %arg4: memref<128x128xbf16, #tpu.memory_space<vmem>>, %arg5: memref<128x128xbf16, #tpu.memory_space<vmem>>, %arg6: memref<16x128xf32, #tpu.memory_space<vmem>>, %arg7: memref<16x128xf32, #tpu.memory_space<vmem>>) attributes {dimension_semantics = [#tpu.dimension_semantics<parallel>, #tpu.dimension_semantics<arbitrary>], iteration_bounds = array<i64: 1, 11>, scalar_prefetch = 0 : i64, scratch_operands = 1 : i64, tpu.core_type = #tpu.core_type<tc>, window_params = [{transform_indices = @transform_0, window_bounds = array<i64: 16, 128>}, {transform_indices = @transform_1, window_bounds = array<i64: 128, 128>}, {transform_indices = @transform_2, window_bounds = array<i64: 128, 128>}, {transform_indices = @transform_3, window_bounds = array<i64: 128, 128>}, {transform_indices = @transform_4, window_bounds = array<i64: 16, 128>}]} {
    %c0_i32 = arith.constant 0 : i32
    %0 = arith.cmpi eq, %arg1, %c0_i32 : i32
    %1 = arith.extui %0 : i1 to i32
    %c0_i32_0 = arith.constant 0 : i32
    %2 = arith.cmpi ne, %1, %c0_i32_0 : i32
    scf.if %2 {
      %cst_18 = arith.constant 0.000000e+00 : f32
      %26 = vector.broadcast %cst_18 : f32 to vector<16x128xf32>
      %c0_19 = arith.constant 0 : index
      %c0_20 = arith.constant 0 : index
      %27 = vector.load %arg7[%c0_19, %c0_20] : memref<16x128xf32, #tpu.memory_space<vmem>>, vector<16x128xf32>
      tpu.vector_store %arg7[%c0_19, %c0_20], %26 {strides = array<i32>} : memref<16x128xf32, #tpu.memory_space<vmem>>, vector<16x128xf32>,
    } else {
    }
    %c0 = arith.constant 0 : index
    %c0_1 = arith.constant 0 : index
    %3 = vector.load %arg2[%c0, %c0_1] : memref<16x128xbf16, #tpu.memory_space<vmem>>, vector<16x128xbf16>
    %c0_2 = arith.constant 0 : index
    %c0_3 = arith.constant 0 : index
    %4 = vector.load %arg3[%c0_2, %c0_3] : memref<128x128xbf16, #tpu.memory_space<vmem>>, vector<128x128xbf16>
    %cst = arith.constant dense<0.000000e+00> : vector<16x128xf32>
    %5 = tpu.matmul %3, %4, %cst {dimension_numbers = #tpu.dot_dimension_numbers<[1], [0], [0], [1], [0, 0, 1, 1], [], []>} : vector<16x128xbf16>, vector<128x128xbf16>, vector<16x128xf32> -> vector<16x128xf32>
    %c0_4 = arith.constant 0 : index
    %c0_5 = arith.constant 0 : index
    %6 = vector.load %arg4[%c0_4, %c0_5] : memref<128x128xbf16, #tpu.memory_space<vmem>>, vector<128x128xbf16>
    %cst_6 = arith.constant dense<0.000000e+00> : vector<16x128xf32>
    %7 = tpu.matmul %3, %6, %cst_6 {dimension_numbers = #tpu.dot_dimension_numbers<[1], [0], [0], [1], [0, 0, 1, 1], [], []>} : vector<16x128xbf16>, vector<128x128xbf16>, vector<16x128xf32> -> vector<16x128xf32>
    %cst_7 = arith.constant 0.000000e+00 : f32
    %8 = vector.broadcast %cst_7 : f32 to vector<16x128xf32>
    %9 = arith.subf %8, %5 : vector<16x128xf32>
    %10 = math.exp %9 : vector<16x128xf32>
    %cst_8 = arith.constant 1.000000e+00 : f32
    %11 = vector.broadcast %cst_8 : f32 to vector<16x128xf32>
    %12 = arith.addf %11, %10 : vector<16x128xf32>
    %cst_9 = arith.constant 1.000000e+00 : f32
    %13 = vector.broadcast %cst_9 : f32 to vector<16x128xf32>
    %14 = arith.divf %13, %12 : vector<16x128xf32>
    %15 = arith.mulf %5, %14 : vector<16x128xf32>
    %16 = arith.mulf %15, %7 : vector<16x128xf32>
    %c0_10 = arith.constant 0 : index
    %c0_11 = arith.constant 0 : index
    %17 = vector.load %arg7[%c0_10, %c0_11] : memref<16x128xf32, #tpu.memory_space<vmem>>, vector<16x128xf32>
    %18 = arith.truncf %16 : vector<16x128xf32> to vector<16x128xbf16>
    %c0_12 = arith.constant 0 : index
    %c0_13 = arith.constant 0 : index
    %19 = vector.load %arg5[%c0_12, %c0_13] : memref<128x128xbf16, #tpu.memory_space<vmem>>, vector<128x128xbf16>
    %cst_14 = arith.constant dense<0.000000e+00> : vector<16x128xf32>
    %20 = tpu.matmul %18, %19, %cst_14 {dimension_numbers = #tpu.dot_dimension_numbers<[1], [0], [0], [1], [0, 0, 1, 1], [], []>} : vector<16x128xbf16>, vector<128x128xbf16>, vector<16x128xf32> -> vector<16x128xf32>
    %21 = arith.addf %17, %20 : vector<16x128xf32>
    %c0_15 = arith.constant 0 : index
    %c0_16 = arith.constant 0 : index
    %22 = vector.load %arg7[%c0_15, %c0_16] : memref<16x128xf32, #tpu.memory_space<vmem>>, vector<16x128xf32>
    tpu.vector_store %arg7[%c0_15, %c0_16], %21 {strides = array<i32>} : memref<16x128xf32, #tpu.memory_space<vmem>>, vector<16x128xf32>,
    %c10_i32 = arith.constant 10 : i32
    %23 = arith.cmpi eq, %arg1, %c10_i32 : i32
    %24 = arith.extui %23 : i1 to i32
    %c0_i32_17 = arith.constant 0 : i32
    %25 = arith.cmpi ne, %24, %c0_i32_17 : i32
    scf.if %25 {
      %c0_18 = arith.constant 0 : index
      %c0_19 = arith.constant 0 : index
      %26 = vector.load %arg7[%c0_18, %c0_19] : memref<16x128xf32, #tpu.memory_space<vmem>>, vector<16x128xf32>
      %c0_20 = arith.constant 0 : index
      %c0_21 = arith.constant 0 : index
      %27 = vector.load %arg6[%c0_20, %c0_21] : memref<16x128xf32, #tpu.memory_space<vmem>>, vector<16x128xf32>
      tpu.vector_store %arg6[%c0_20, %c0_21], %26 {strides = array<i32>} : memref<16x128xf32, #tpu.memory_space<vmem>>, vector<16x128xf32>,
    } else {
    }
    return
  }
  func.func @transform_0(%arg0: i32, %arg1: i32) -> (i32, i32) {
    %c0_i32 = arith.constant 0 : i32
    %c0_i32_0 = arith.constant 0 : i32
    return %arg0, %c0_i32 : i32, i32
  }
  func.func @transform_1(%arg0: i32, %arg1: i32) -> (i32, i32) {
    %c0_i32 = arith.constant 0 : i32
    %c0_i32_0 = arith.constant 0 : i32
    return %c0_i32, %arg1 : i32, i32
  }
  func.func @transform_2(%arg0: i32, %arg1: i32) -> (i32, i32) {
    %c0_i32 = arith.constant 0 : i32
    %c0_i32_0 = arith.constant 0 : i32
    return %c0_i32, %arg1 : i32, i32
  }
  func.func @transform_3(%arg0: i32, %arg1: i32) -> (i32, i32) {
    %c0_i32 = arith.constant 0 : i32
    %c0_i32_0 = arith.constant 0 : i32
    return %arg1, %c0_i32 : i32, i32
  }
  func.func @transform_4(%arg0: i32, %arg1: i32) -> (i32, i32) {
    %c0_i32 = arith.constant 0 : i32
    %c0_i32_0 = arith.constant 0 : i32
    return %arg0, %c0_i32 : i32, i32
  }
}

</mosaic_0001>

<llo_original>
// kernel: tpu_custom_call.1
$region0: #{tpu_custom_call.1}
  #allocation0 [shape = 'u32[]', space=smem, size = 0x4, offset = 0x4, fixed_abs, tag = 'smem constant byte address 0x4 - core index']
  #allocation1 [shape = 'u32[144,128]{1,0:T(1,128)}', space=vmem, size = 0x12000, scoped, tag = 'internal scratch']
  #allocation2 [shape = 'f32[16,128]{1,0:T(8,128)}', space=vmem, size = 0x2000, scoped, tag = 'scratch operand']
  %s0 = inlined_call_operand.hbm [shape: bf16[16,128], index: 0, kind: input, shape index: {}]
  %s1 = inlined_call_operand.hbm [shape: bf16[128,1408], index: 1, kind: input, shape index: {}]
  %s2 = inlined_call_operand.hbm [shape: bf16[128,1408], index: 2, kind: input, shape index: {}]
  %s3 = inlined_call_operand.hbm [shape: bf16[1408,128], index: 3, kind: input, shape index: {}]
  %s4 = inlined_call_operand.hbm [shape: f32[16,128], index: 4, kind: output, shape index: {}]
  %s5 = sld [smem:[#allocation0]]
  $region73: #{tpu_custom_call.1} parent=0
    _
  %s7 = ssub.s32 1, %s5
  %s8 = scalar_select 0, %s7, %s5
  $region1: #{tpu_custom_call.1} parent=0
    #allocation3 [shape = 'u8[4096]{0}', space=vmem, size = 0x1000, scoped, tag = 'input window, operand 0, single buffered']
    #allocation4 [shape = 's32[2]{0}', space=sflag, size = 0x8, scoped, tag = 'scoped memory for tpu_custom_call.1']
    #allocation5 [shape = 's32[2]{0}', space=sflag, size = 0x8, scoped, tag = 'scoped memory for tpu_custom_call.1']
    #allocation6 [shape = 'u8[65536]{0}', space=vmem, size = 0x10000, scoped, tag = 'input window, operand 1']
    #allocation7 [shape = 's32[2]{0}', space=sflag, size = 0x8, scoped, tag = 'scoped memory for tpu_custom_call.1']
    #allocation8 [shape = 'u8[65536]{0}', space=vmem, size = 0x10000, scoped, tag = 'input window, operand 2']
    #allocation9 [shape = 'u8[65536]{0}', space=vmem, size = 0x10000, scoped, tag = 'input window, operand 3']
    #allocation10 [shape = 's32[2]{0}', space=sflag, size = 0x8, scoped, tag = 'scoped memory for tpu_custom_call.1']
    #allocation11 [shape = 'u8[8192]{0}', space=vmem, size = 0x2000, scoped, tag = 'output window, operand 0, single buffered']
    %9 = vsyncpa [#allocation4], 0
    %10 = vsyncpa [#allocation7], 0
    %s11 = scalar_lea.sflag [#allocation7], 1
    %12 = vsyncpa %s11, 0
    %13 = vsyncpa [#allocation10], 0
    %s14 = scalar_lea.sflag [#allocation10], 1
    %15 = vsyncpa %s14, 0
    %16 = vsyncpa [#allocation5], 0
    loop: start=0, step=1, limit=13
    $region2: #{tpu_custom_call.1} parent=1 // loop_pre_header
      _
    $region3: #{tpu_custom_call.1} parent=1 // loop_header
      %s18 = sphi 0, %s22
      %p19 = scmp.ge.s32.totalorder %s18, 13
      %s25 = sphi 0, %s37
      %s26 = sphi 0, %s33
      %s27 = sphi 0, %s25
      %s28 = sphi 0, %s26
      %s29 = sphi 0, %s27
      %s30 = sphi 0, %s28
      %s40 = sphi 0, %s42
      %s43 = sphi 0, %s40
      %s44 = sphi 0, %s43
      %s60 = sphi 0, %s44
      %s66 = sphi 0, %s68
      %s69 = sphi 0, %s66
      %s70 = sphi 0, %s69
      %s86 = sphi 0, %s70
      %s92 = sphi 0, %s94
      %s95 = sphi 0, %s92
      %s96 = sphi 0, %s95
      %s112 = sphi 0, %s96
      %s118 = sphi 0, %s120
      %s121 = sphi 0, %s118
      %s122 = sphi 0, %s121
      %s138 = sphi 0, %s122
      %s144 = sphi 0, %s146
      %s147 = sphi 0, %s144
      %s148 = sphi 0, %s147
      %s164 = sphi 0, %s148
    $region4: #{tpu_custom_call.1} parent=1 // loop_header_branch
      %21 = sbr.rel (%p19) target = $region8
    $region5: #{tpu_custom_call.1} parent=1 // loop_body
      %s23 = ssub.s32 %s18, 1
      %s24 = ssub.s32 %s18, 2
      %s31 = sadd.s32 1, %s26
      %p32 = scmp.ge.s32.totalorder %s31, 11
      %s33 = scalar_select %p32, 0, %s31
      %s34 = sadd.s32 1, %s25
      %s35 = scalar_select %p32, %s34, %s25
      %p36 = scmp.ge.s32.totalorder %s35, 1
      %s37 = scalar_select %p36, 0, %s35
      %s38 = ssub.s32 %s25, %s37
      %p39 = scmp.eq.s32.totalorder %s38, 0
      %s41 = sadd.s32 %s40, 1
      %s42 = scalar_select %p39, %s40, %s41
      %p45 = pneg %p39
      %p46 = scmp.eq.s32.totalorder %s18, 10
      %p47 = por %p45, %p46
      %p48 = scmp.ne.s32.totalorder %s40, %s43
      %p49 = scmp.eq.s32.totalorder %s18, 0
      %p50 = por %p48, %p49
      %p51 = scmp.ne.s32.totalorder %s40, %s43
      %p52 = scmp.eq.s32.totalorder %s23, 10
      %p53 = por %p51, %p52
      %p54 = scmp.ne.s32.totalorder %s43, %s44
      %p55 = scmp.eq.s32.totalorder %s23, 0
      %p56 = por %p54, %p55
      %p57 = scmp.ne.s32.totalorder %s43, %s44
      %p58 = scmp.eq.s32.totalorder %s24, 10
      %p59 = por %p57, %p58
      %p61 = scmp.ne.s32.totalorder %s44, %s60
      %p62 = scmp.eq.s32.totalorder %s24, 0
      %p63 = por %p61, %p62
      %s64 = ssub.s32 %s26, %s33
      %p65 = scmp.eq.s32.totalorder %s64, 0
      %s67 = sadd.s32 %s66, 1
      %s68 = scalar_select %p65, %s66, %s67
      %p71 = pneg %p65
      %p72 = scmp.eq.s32.totalorder %s18, 10
      %p73 = por %p71, %p72
      %p74 = scmp.ne.s32.totalorder %s66, %s69
      %p75 = scmp.eq.s32.totalorder %s18, 0
      %p76 = por %p74, %p75
      %p77 = scmp.ne.s32.totalorder %s66, %s69
      %p78 = scmp.eq.s32.totalorder %s23, 10
      %p79 = por %p77, %p78
      %p80 = scmp.ne.s32.totalorder %s69, %s70
      %p81 = scmp.eq.s32.totalorder %s23, 0
      %p82 = por %p80, %p81
      %p83 = scmp.ne.s32.totalorder %s69, %s70
      %p84 = scmp.eq.s32.totalorder %s24, 10
      %p85 = por %p83, %p84
      %p87 = scmp.ne.s32.totalorder %s70, %s86
      %p88 = scmp.eq.s32.totalorder %s24, 0
      %p89 = por %p87, %p88
      %s90 = ssub.s32 %s26, %s33
      %p91 = scmp.eq.s32.totalorder %s90, 0
      %s93 = sadd.s32 %s92, 1
      %s94 = scalar_select %p91, %s92, %s93
      %p97 = pneg %p91
      %p98 = scmp.eq.s32.totalorder %s18, 10
      %p99 = por %p97, %p98
      %p100 = scmp.ne.s32.totalorder %s92, %s95
      %p101 = scmp.eq.s32.totalorder %s18, 0
      %p102 = por %p100, %p101
      %p103 = scmp.ne.s32.totalorder %s92, %s95
      %p104 = scmp.eq.s32.totalorder %s23, 10
      %p105 = por %p103, %p104
      %p106 = scmp.ne.s32.totalorder %s95, %s96
      %p107 = scmp.eq.s32.totalorder %s23, 0
      %p108 = por %p106, %p107
      %p109 = scmp.ne.s32.totalorder %s95, %s96
      %p110 = scmp.eq.s32.totalorder %s24, 10
      %p111 = por %p109, %p110
      %p113 = scmp.ne.s32.totalorder %s96, %s112
      %p114 = scmp.eq.s32.totalorder %s24, 0
      %p115 = por %p113, %p114
      %s116 = ssub.s32 %s26, %s33
      %p117 = scmp.eq.s32.totalorder %s116, 0
      %s119 = sadd.s32 %s118, 1
      %s120 = scalar_select %p117, %s118, %s119
      %p123 = pneg %p117
      %p124 = scmp.eq.s32.totalorder %s18, 10
      %p125 = por %p123, %p124
      %p126 = scmp.ne.s32.totalorder %s118, %s121
      %p127 = scmp.eq.s32.totalorder %s18, 0
      %p128 = por %p126, %p127
      %p129 = scmp.ne.s32.totalorder %s118, %s121
      %p130 = scmp.eq.s32.totalorder %s23, 10
      %p131 = por %p129, %p130
      %p132 = scmp.ne.s32.totalorder %s121, %s122
      %p133 = scmp.eq.s32.totalorder %s23, 0
      %p134 = por %p132, %p133
      %p135 = scmp.ne.s32.totalorder %s121, %s122
      %p136 = scmp.eq.s32.totalorder %s24, 10
      %p137 = por %p135, %p136
      %p139 = scmp.ne.s32.totalorder %s122, %s138
      %p140 = scmp.eq.s32.totalorder %s24, 0
      %p141 = por %p139, %p140
      %s142 = ssub.s32 %s25, %s37
      %p143 = scmp.eq.s32.totalorder %s142, 0
      %s145 = sadd.s32 %s144, 1
      %s146 = scalar_select %p143, %s144, %s145
      %p149 = pneg %p143
      %p150 = scmp.eq.s32.totalorder %s18, 10
      %p151 = por %p149, %p150
      %p152 = scmp.ne.s32.totalorder %s144, %s147
      %p153 = scmp.eq.s32.totalorder %s18, 0
      %p154 = por %p152, %p153
      %p155 = scmp.ne.s32.totalorder %s144, %s147
      %p156 = scmp.eq.s32.totalorder %s23, 10
      %p157 = por %p155, %p156
      %p158 = scmp.ne.s32.totalorder %s147, %s148
      %p159 = scmp.eq.s32.totalorder %s23, 0
      %p160 = por %p158, %p159
      %p161 = scmp.ne.s32.totalorder %s147, %s148
      %p162 = scmp.eq.s32.totalorder %s24, 10
      %p163 = por %p161, %p162
      %p165 = scmp.ne.s32.totalorder %s148, %s164
      %p166 = scmp.eq.s32.totalorder %s24, 0
      %p167 = por %p165, %p166
      %p168 = scmp.le.s32.totalorder 1, %s18
      %p169 = scmp.lt.s32.totalorder %s18, 12
      %p170 = pnand %p168, %p169
      %p171 = pneg %p170
      // Predicated region
      $region9: #{tpu_custom_call.1} parent=5 // pred_check
        _
      $region10: #{tpu_custom_call.1} parent=5 // pred_check_branch
        %173 = sbr.rel (%p170) target = $region12
      $region11: #{tpu_custom_call.1} parent=5 // pred_region
        %s174 = ssub.s32 %s18, 1
        // Predicated region
        $region13: #{tpu_custom_call.1} parent=11 // pred_check
          %p175 = pneg %p56
        $region14: #{tpu_custom_call.1} parent=11 // pred_check_branch
          %177 = sbr.rel (%p175) target = $region16
        $region15: #{tpu_custom_call.1} parent=11 // pred_region
          %s178 = smul.u32 2, %s27
          %s180 = ssub.s32 128, 128
          %181 = vsyncadd [#allocation4], %s180
          %s182 = smul.addr %s178, 64
          %s183 = scalar_lea.hbm %s0, %s182
          %s184 = sshll.u32 [#allocation3], 4
          %s185 = int_to_ptr.vmem [resolvable:$true] %s184
          %190 = dma.hbm_to_vmem [thread:$0]  %s183, 128, %s185, [#allocation4], 64, 64, 4
        $region16: #{tpu_custom_call.1} parent=11 // pred_fallthru
          _
      $region12: #{tpu_custom_call.1} parent=5 // pred_fallthru
        _
      %p191 = scmp.lt.s32.totalorder %s18, 11
      // Predicated region
      $region17: #{tpu_custom_call.1} parent=5 // pred_check
        %p192 = pneg %p191
      $region18: #{tpu_custom_call.1} parent=5 // pred_check_branch
        %194 = sbr.rel (%p192) target = $region20
      $region19: #{tpu_custom_call.1} parent=5 // pred_region
        // Predicated region
        $region21: #{tpu_custom_call.1} parent=19 // pred_check
          %p195 = pneg %p76
        $region22: #{tpu_custom_call.1} parent=19 // pred_check_branch
          %197 = sbr.rel (%p195) target = $region24
        $region23: #{tpu_custom_call.1} parent=19 // pred_region
          %s198 = sand.u32 %s18, 1
          %s199 = scalar_lea.sflag [#allocation7], %s198
          %s200 = sand.u32 %s66, 1
          %s201 = smul.addr %s200, 64
          %s202 = scalar_lea.vmem [#allocation6], %s201
          %s204 = ssub.s32 1024, 1024
          %205 = vsyncadd %s199, %s204
          %s206 = smul.addr %s26, 64
          %s207 = scalar_lea.hbm %s1, %s206
          %s208 = sshll.u32 %s202, 4
          %s209 = int_to_ptr.vmem [resolvable:$true] %s208
          %214 = dma.hbm_to_vmem [thread:$0]  %s207, 1024, %s209, %s199, 704, 64, 4
        $region24: #{tpu_custom_call.1} parent=19 // pred_fallthru
          _
        // Predicated region
        $region25: #{tpu_custom_call.1} parent=19 // pred_check
          %p215 = pneg %p102
        $region26: #{tpu_custom_call.1} parent=19 // pred_check_branch
          %217 = sbr.rel (%p215) target = $region28
        $region27: #{tpu_custom_call.1} parent=19 // pred_region
          %s218 = sand.u32 %s18, 1
          %s219 = scalar_lea.sflag [#allocation7], %s218
          %s220 = sand.u32 %s92, 1
          %s221 = smul.addr %s220, 64
          %s222 = scalar_lea.vmem [#allocation8], %s221
          %s224 = ssub.s32 1024, 1024
          %225 = vsyncadd %s219, %s224
          %s226 = smul.addr %s26, 64
          %s227 = scalar_lea.hbm %s2, %s226
          %s228 = sshll.u32 %s222, 4
          %s229 = int_to_ptr.vmem [resolvable:$true] %s228
          %234 = dma.hbm_to_vmem [thread:$0]  %s227, 1024, %s229, %s219, 704, 64, 4
        $region28: #{tpu_custom_call.1} parent=19 // pred_fallthru
          _
        // Predicated region
        $region29: #{tpu_custom_call.1} parent=19 // pred_check
          %p235 = pneg %p128
        $region30: #{tpu_custom_call.1} parent=19 // pred_check_branch
          %237 = sbr.rel (%p235) target = $region32
        $region31: #{tpu_custom_call.1} parent=19 // pred_region
          %s238 = sand.u32 %s118, 1
          %s239 = scalar_lea.sflag [#allocation10], %s238
          %s240 = sand.u32 %s118, 1
          %s241 = smul.addr %s240, 64
          %s242 = scalar_lea.vmem [#allocation9], %s241
          %s243 = smul.u32 16, %s26
          %s245 = ssub.s32 1024, 1024
          %246 = vsyncadd %s239, %s245
          %s247 = smul.addr %s243, 64
          %s248 = scalar_lea.hbm %s3, %s247
          %s249 = sshll.u32 %s242, 4
          %s250 = int_to_ptr.vmem [resolvable:$true] %s249
          %255 = dma.hbm_to_vmem [thread:$0]  %s248, 1024, %s250, %s239, 64, 64, 4
        $region32: #{tpu_custom_call.1} parent=19 // pred_fallthru
          _
      $region20: #{tpu_custom_call.1} parent=5 // pred_fallthru
        _
      %p256 = scmp.le.s32.totalorder 1, %s18
      %p257 = scmp.lt.s32.totalorder %s18, 12
      %p258 = pnand %p256, %p257
      %p259 = pneg %p258
      // Predicated region
      $region33: #{tpu_custom_call.1} parent=5 // pred_check
        _
      $region34: #{tpu_custom_call.1} parent=5 // pred_check_branch
        %261 = sbr.rel (%p258) target = $region36
      $region35: #{tpu_custom_call.1} parent=5 // pred_region
        %s262 = ssub.s32 %s18, 1
        // Predicated region
        $region37: #{tpu_custom_call.1} parent=35 // pred_check
          %p263 = pneg %p56
        $region38: #{tpu_custom_call.1} parent=35 // pred_check_branch
          %265 = sbr.rel (%p263) target = $region40
        $region39: #{tpu_custom_call.1} parent=35 // pred_region
          %266 = dma.done [#allocation4], 128
        $region40: #{tpu_custom_call.1} parent=35 // pred_fallthru
          _
        %s267 = sand.u32 %s23, 1
        %s268 = scalar_lea.sflag [#allocation7], %s267
        %s269 = sand.u32 %s69, 1
        %s270 = smul.addr %s269, 64
        %s271 = scalar_lea.vmem [#allocation6], %s270
        // Predicated region
        $region41: #{tpu_custom_call.1} parent=35 // pred_check
          %p272 = pneg %p82
        $region42: #{tpu_custom_call.1} parent=35 // pred_check_branch
          %274 = sbr.rel (%p272) target = $region44
        $region43: #{tpu_custom_call.1} parent=35 // pred_region
          %275 = dma.done %s268, 1024
        $region44: #{tpu_custom_call.1} parent=35 // pred_fallthru
          _
        %s276 = sand.u32 %s23, 1
        %s277 = scalar_lea.sflag [#allocation7], %s276
        %s278 = sand.u32 %s95, 1
        %s279 = smul.addr %s278, 64
        %s280 = scalar_lea.vmem [#allocation8], %s279
        // Predicated region
        $region45: #{tpu_custom_call.1} parent=35 // pred_check
          %p281 = pneg %p108
        $region46: #{tpu_custom_call.1} parent=35 // pred_check_branch
          %283 = sbr.rel (%p281) target = $region48
        $region47: #{tpu_custom_call.1} parent=35 // pred_region
          %284 = dma.done %s277, 1024
        $region48: #{tpu_custom_call.1} parent=35 // pred_fallthru
          _
        %s285 = sand.u32 %s121, 1
        %s286 = scalar_lea.sflag [#allocation10], %s285
        %s287 = sand.u32 %s121, 1
        %s288 = smul.addr %s287, 64
        %s289 = scalar_lea.vmem [#allocation9], %s288
        // Predicated region
        $region49: #{tpu_custom_call.1} parent=35 // pred_check
          %p290 = pneg %p134
        $region50: #{tpu_custom_call.1} parent=35 // pred_check_branch
          %292 = sbr.rel (%p290) target = $region52
        $region51: #{tpu_custom_call.1} parent=35 // pred_region
          %293 = dma.done %s286, 1024
        $region52: #{tpu_custom_call.1} parent=35 // pred_fallthru
          _
        %p294 = pneg %p56
        %p295 = pneg %p53
        %s296 = sand.u32 %s23, 1
        %s297 = scalar_lea.sflag [#allocation7], %s296
        %s298 = sand.u32 %s69, 1
        %s299 = smul.addr %s298, 64
        %s300 = scalar_lea.vmem [#allocation6], %s299
        %p301 = pneg %p82
        %p302 = pneg %p79
        %s303 = sand.u32 %s23, 1
        %s304 = scalar_lea.sflag [#allocation7], %s303
        %s305 = sand.u32 %s95, 1
        %s306 = smul.addr %s305, 64
        %s307 = scalar_lea.vmem [#allocation8], %s306
        %p308 = pneg %p108
        %p309 = pneg %p105
        %s310 = sand.u32 %s121, 1
        %s311 = scalar_lea.sflag [#allocation10], %s310
        %s312 = sand.u32 %s121, 1
        %s313 = smul.addr %s312, 64
        %s314 = scalar_lea.vmem [#allocation9], %s313
        %p315 = pneg %p134
        %p316 = pneg %p131
        %p317 = pneg %p160
        %p318 = pneg %p157
        %s319 = smul.u32 2, %s27
        %s320 = smul.u32 16, %s28
        %s321 = smul.u32 2, %s27
        %p323 = scmp.eq.s32.totalorder %s28, 0
        // Predicated region
        $region53: #{tpu_custom_call.1} parent=35 // pred_check
          %p324 = pneg %p323
        $region54: #{tpu_custom_call.1} parent=35 // pred_check_branch
          %326 = sbr.rel (%p324) target = $region56
        $region55: #{tpu_custom_call.1} parent=35 // pred_region
          %327 = vst [vmem:[#allocation2] sm:$0xff] 0.0
          %328 = vst [vmem:[#allocation2 + $0x8] sm:$0xff] 0.0
        $region56: #{tpu_custom_call.1} parent=35 // pred_fallthru
          _
        %v329 = vld [vmem:[#allocation3] sm:$0xf]
        %v330 = vld [vmem:[#allocation3 + $0x4] sm:$0xf]
        %v331 = vld [vmem:[%s271] sm:$0xf]
        %v332 = vld [vmem:[%s271 + $0x4] sm:$0xf]
        %v333 = vld [vmem:[%s271 + $0x8] sm:$0xf]
        %v334 = vld [vmem:[%s271 + $0xc] sm:$0xf]
        %v335 = vld [vmem:[%s271 + $0x10] sm:$0xf]
        %v336 = vld [vmem:[%s271 + $0x14] sm:$0xf]
        %v337 = vld [vmem:[%s271 + $0x18] sm:$0xf]
        %v338 = vld [vmem:[%s271 + $0x1c] sm:$0xf]
        %v339 = vld [vmem:[%s271 + $0x20] sm:$0xf]
        %v340 = vld [vmem:[%s271 + $0x24] sm:$0xf]
        %v341 = vld [vmem:[%s271 + $0x28] sm:$0xf]
        %v342 = vld [vmem:[%s271 + $0x2c] sm:$0xf]
        %v343 = vld [vmem:[%s271 + $0x30] sm:$0xf]
        %v344 = vld [vmem:[%s271 + $0x34] sm:$0xf]
        %v345 = vld [vmem:[%s271 + $0x38] sm:$0xf]
        %v346 = vld [vmem:[%s271 + $0x3c] sm:$0xf]
        %v349 = vunpack.c.l.b16 %v329
        %v350 = vunpack.c.l.b16 %v330
        %v351 = vpack.c.b16 %v350, %v349
        %v369 = vunpack.c.l.b16 %v331
        %v370 = vunpack.c.l.b16 %v332
        %v371 = vunpack.c.l.b16 %v333
        %v372 = vunpack.c.l.b16 %v334
        %v373 = vunpack.c.l.b16 %v335
        %v374 = vunpack.c.l.b16 %v336
        %v375 = vunpack.c.l.b16 %v337
        %v376 = vunpack.c.l.b16 %v338
        %v377 = vunpack.c.l.b16 %v339
        %v378 = vunpack.c.l.b16 %v340
        %v379 = vunpack.c.l.b16 %v341
        %v380 = vunpack.c.l.b16 %v342
        %v381 = vunpack.c.l.b16 %v343
        %v382 = vunpack.c.l.b16 %v344
        %v383 = vunpack.c.l.b16 %v345
        %v384 = vunpack.c.l.b16 %v346
        %v385 = vpack.c.b16 %v370, %v369
        %v386 = vpack.c.b16 %v372, %v371
        %v387 = vpack.c.b16 %v374, %v373
        %v388 = vpack.c.b16 %v376, %v375
        %v389 = vpack.c.b16 %v378, %v377
        %v390 = vpack.c.b16 %v380, %v379
        %v391 = vpack.c.b16 %v382, %v381
        %v392 = vpack.c.b16 %v384, %v383
        %401 = vmatprep.subr.bf16.mxu0 0
        %402 = vmatpush1.bf16.msra.mxu0 %v385
        %403 = vmatprep.subr.bf16.mxu0 0
        %404 = vmatpush1.bf16.msra.mxu0 %v386
        %405 = vmatprep.subr.bf16.mxu0 0
        %406 = vmatpush1.bf16.msra.mxu0 %v387
        %407 = vmatprep.subr.bf16.mxu0 0
        %408 = vmatpush1.bf16.msra.mxu0 %v388
        %409 = vmatprep.subr.bf16.mxu0 0
        %410 = vmatpush1.bf16.msra.mxu0 %v389
        %411 = vmatprep.subr.bf16.mxu0 0
        %412 = vmatpush1.bf16.msra.mxu0 %v390
        %413 = vmatprep.subr.bf16.mxu0 0
        %414 = vmatpush1.bf16.msra.mxu0 %v391
        %415 = vmatprep.subr.bf16.mxu0 0
        %416 = vmatpush1.bf16.msra.mxu0 %v392
        %417 = vmatprep.subr.bf16.mxu0 0
        %418 = vmatpush1.bf16.msra.mxu0 0
        %419 = vmatprep.subr.bf16.mxu0 0
        %420 = vmatpush1.bf16.msra.mxu0 0
        %421 = vmatprep.subr.bf16.mxu0 0
        %422 = vmatpush1.bf16.msra.mxu0 0
        %423 = vmatprep.subr.bf16.mxu0 0
        %424 = vmatpush1.bf16.msra.mxu0 0
        %425 = vmatprep.subr.bf16.mxu0 0
        %426 = vmatpush1.bf16.msra.mxu0 0
        %427 = vmatprep.subr.bf16.mxu0 0
        %428 = vmatpush1.bf16.msra.mxu0 0
        %429 = vmatprep.subr.bf16.mxu0 0
        %430 = vmatpush1.bf16.msra.mxu0 0
        %431 = vmatprep.subr.bf16.mxu0 0
        %432 = vmatpush1.bf16.msra.mxu0 0
        %433 = vmatprep.mubr.bf16.mxu0 0
        %434 = vmatmul.mubr.bf16.gmra.mrb[0].mxu0 %v351
        %v435 = vpop.f32.mrb[0].mxu0
        %v436 = vadd.f32 0.0, %v435
        %v437 = vpop.f32.mrb[0].mxu0
        %v438 = vpop.f32.mrb[0].mxu0
        %v439 = vadd.f32 0.0, %v438
        %v440 = vpop.f32.mrb[0].mxu0
        %441 = vdwg.mxu0
        %v442 = vld [vmem:[%s280] sm:$0xf]
        %v443 = vld [vmem:[%s280 + $0x4] sm:$0xf]
        %v444 = vld [vmem:[%s280 + $0x8] sm:$0xf]
        %v445 = vld [vmem:[%s280 + $0xc] sm:$0xf]
        %v446 = vld [vmem:[%s280 + $0x10] sm:$0xf]
        %v447 = vld [vmem:[%s280 + $0x14] sm:$0xf]
        %v448 = vld [vmem:[%s280 + $0x18] sm:$0xf]
        %v449 = vld [vmem:[%s280 + $0x1c] sm:$0xf]
        %v450 = vld [vmem:[%s280 + $0x20] sm:$0xf]
        %v451 = vld [vmem:[%s280 + $0x24] sm:$0xf]
        %v452 = vld [vmem:[%s280 + $0x28] sm:$0xf]
        %v453 = vld [vmem:[%s280 + $0x2c] sm:$0xf]
        %v454 = vld [vmem:[%s280 + $0x30] sm:$0xf]
        %v455 = vld [vmem:[%s280 + $0x34] sm:$0xf]
        %v456 = vld [vmem:[%s280 + $0x38] sm:$0xf]
        %v457 = vld [vmem:[%s280 + $0x3c] sm:$0xf]
        %v474 = vunpack.c.l.b16 %v442
        %v475 = vunpack.c.l.b16 %v443
        %v476 = vunpack.c.l.b16 %v444
        %v477 = vunpack.c.l.b16 %v445
        %v478 = vunpack.c.l.b16 %v446
        %v479 = vunpack.c.l.b16 %v447
        %v480 = vunpack.c.l.b16 %v448
        %v481 = vunpack.c.l.b16 %v449
        %v482 = vunpack.c.l.b16 %v450
        %v483 = vunpack.c.l.b16 %v451
        %v484 = vunpack.c.l.b16 %v452
        %v485 = vunpack.c.l.b16 %v453
        %v486 = vunpack.c.l.b16 %v454
        %v487 = vunpack.c.l.b16 %v455
        %v488 = vunpack.c.l.b16 %v456
        %v489 = vunpack.c.l.b16 %v457
        %v490 = vpack.c.b16 %v475, %v474
        %v491 = vpack.c.b16 %v477, %v476
        %v492 = vpack.c.b16 %v479, %v478
        %v493 = vpack.c.b16 %v481, %v480
        %v494 = vpack.c.b16 %v483, %v482
        %v495 = vpack.c.b16 %v485, %v484
        %v496 = vpack.c.b16 %v487, %v486
        %v497 = vpack.c.b16 %v489, %v488
        %506 = vmatprep.subr.bf16.mxu0 0
        %507 = vmatpush1.bf16.msra.mxu0 %v490
        %508 = vmatprep.subr.bf16.mxu0 0
        %509 = vmatpush1.bf16.msra.mxu0 %v491
        %510 = vmatprep.subr.bf16.mxu0 0
        %511 = vmatpush1.bf16.msra.mxu0 %v492
        %512 = vmatprep.subr.bf16.mxu0 0
        %513 = vmatpush1.bf16.msra.mxu0 %v493
        %514 = vmatprep.subr.bf16.mxu0 0
        %515 = vmatpush1.bf16.msra.mxu0 %v494
        %516 = vmatprep.subr.bf16.mxu0 0
        %517 = vmatpush1.bf16.msra.mxu0 %v495
        %518 = vmatprep.subr.bf16.mxu0 0
        %519 = vmatpush1.bf16.msra.mxu0 %v496
        %520 = vmatprep.subr.bf16.mxu0 0
        %521 = vmatpush1.bf16.msra.mxu0 %v497
        %522 = vmatprep.subr.bf16.mxu0 0
        %523 = vmatpush1.bf16.msra.mxu0 0
        %524 = vmatprep.subr.bf16.mxu0 0
        %525 = vmatpush1.bf16.msra.mxu0 0
        %526 = vmatprep.subr.bf16.mxu0 0
        %527 = vmatpush1.bf16.msra.mxu0 0
        %528 = vmatprep.subr.bf16.mxu0 0
        %529 = vmatpush1.bf16.msra.mxu0 0
        %530 = vmatprep.subr.bf16.mxu0 0
        %531 = vmatpush1.bf16.msra.mxu0 0
        %532 = vmatprep.subr.bf16.mxu0 0
        %533 = vmatpush1.bf16.msra.mxu0 0
        %534 = vmatprep.subr.bf16.mxu0 0
        %535 = vmatpush1.bf16.msra.mxu0 0
        %536 = vmatprep.subr.bf16.mxu0 0
        %537 = vmatpush1.bf16.msra.mxu0 0
        %538 = vmatprep.mubr.bf16.mxu0 0
        %539 = vmatmul.mubr.bf16.gmra.mrb[0].mxu0 %v351
        %v540 = vpop.f32.mrb[0].mxu0
        %v541 = vadd.f32 0.0, %v540
        %v542 = vpop.f32.mrb[0].mxu0
        %v543 = vpop.f32.mrb[0].mxu0
        %v544 = vadd.f32 0.0, %v543
        %v545 = vpop.f32.mrb[0].mxu0
        %546 = vdwg.mxu0
        %v547 = vsub.f32 0.0, %v436
        %v548 = vsub.f32 0.0, %v439
        %v549 = vmul.f32 %v547, 1.442695
        %v550 = vpow.pop %v549
        %v551 = vmul.f32 %v548, 1.442695
        %v552 = vpow.pop %v551
        %v553 = vadd.f32 %v550, 1.0
        %v554 = vadd.f32 %v552, 1.0
        %v555 = vrcp.pop %v553
        %v556 = vmul.f32 1.0, %v555
        %v557 = vrcp.pop %v554
        %v558 = vmul.f32 1.0, %v557
        %v559 = vmul.f32 %v436, %v556
        %v560 = vmul.f32 %v439, %v558
        %v561 = vmul.f32 %v559, %v541
        %v562 = vmul.f32 %v560, %v544
        %v563 = vld [vmem:[#allocation2] sm:$0xff]
        %v564 = vld [vmem:[#allocation2 + $0x8] sm:$0xff]
        %v565 = vpack.c.bf16 %v562, %v561
        %v566 = vld [vmem:[%s289] sm:$0xf]
        %v567 = vld [vmem:[%s289 + $0x4] sm:$0xf]
        %v568 = vld [vmem:[%s289 + $0x8] sm:$0xf]
        %v569 = vld [vmem:[%s289 + $0xc] sm:$0xf]
        %v570 = vld [vmem:[%s289 + $0x10] sm:$0xf]
        %v571 = vld [vmem:[%s289 + $0x14] sm:$0xf]
        %v572 = vld [vmem:[%s289 + $0x18] sm:$0xf]
        %v573 = vld [vmem:[%s289 + $0x1c] sm:$0xf]
        %v574 = vld [vmem:[%s289 + $0x20] sm:$0xf]
        %v575 = vld [vmem:[%s289 + $0x24] sm:$0xf]
        %v576 = vld [vmem:[%s289 + $0x28] sm:$0xf]
        %v577 = vld [vmem:[%s289 + $0x2c] sm:$0xf]
        %v578 = vld [vmem:[%s289 + $0x30] sm:$0xf]
        %v579 = vld [vmem:[%s289 + $0x34] sm:$0xf]
        %v580 = vld [vmem:[%s289 + $0x38] sm:$0xf]
        %v581 = vld [vmem:[%s289 + $0x3c] sm:$0xf]
        %v598 = vunpack.c.l.b16 %v566
        %v599 = vunpack.c.l.b16 %v567
        %v600 = vunpack.c.l.b16 %v568
        %v601 = vunpack.c.l.b16 %v569
        %v602 = vunpack.c.l.b16 %v570
        %v603 = vunpack.c.l.b16 %v571
        %v604 = vunpack.c.l.b16 %v572
        %v605 = vunpack.c.l.b16 %v573
        %v606 = vunpack.c.l.b16 %v574
        %v607 = vunpack.c.l.b16 %v575
        %v608 = vunpack.c.l.b16 %v576
        %v609 = vunpack.c.l.b16 %v577
        %v610 = vunpack.c.l.b16 %v578
        %v611 = vunpack.c.l.b16 %v579
        %v612 = vunpack.c.l.b16 %v580
        %v613 = vunpack.c.l.b16 %v581
        %v614 = vpack.c.b16 %v599, %v598
        %v615 = vpack.c.b16 %v601, %v600
        %v616 = vpack.c.b16 %v603, %v602
        %v617 = vpack.c.b16 %v605, %v604
        %v618 = vpack.c.b16 %v607, %v606
        %v619 = vpack.c.b16 %v609, %v608
        %v620 = vpack.c.b16 %v611, %v610
        %v621 = vpack.c.b16 %v613, %v612
        %630 = vmatprep.subr.bf16.mxu0 0
        %631 = vmatpush1.bf16.msra.mxu0 %v614
        %632 = vmatprep.subr.bf16.mxu0 0
        %633 = vmatpush1.bf16.msra.mxu0 %v615
        %634 = vmatprep.subr.bf16.mxu0 0
        %635 = vmatpush1.bf16.msra.mxu0 %v616
        %636 = vmatprep.subr.bf16.mxu0 0
        %637 = vmatpush1.bf16.msra.mxu0 %v617
        %638 = vmatprep.subr.bf16.mxu0 0
        %639 = vmatpush1.bf16.msra.mxu0 %v618
        %640 = vmatprep.subr.bf16.mxu0 0
        %641 = vmatpush1.bf16.msra.mxu0 %v619
        %642 = vmatprep.subr.bf16.mxu0 0
        %643 = vmatpush1.bf16.msra.mxu0 %v620
        %644 = vmatprep.subr.bf16.mxu0 0
        %645 = vmatpush1.bf16.msra.mxu0 %v621
        %646 = vmatprep.subr.bf16.mxu0 0
        %647 = vmatpush1.bf16.msra.mxu0 0
        %648 = vmatprep.subr.bf16.mxu0 0
        %649 = vmatpush1.bf16.msra.mxu0 0
        %650 = vmatprep.subr.bf16.mxu0 0
        %651 = vmatpush1.bf16.msra.mxu0 0
        %652 = vmatprep.subr.bf16.mxu0 0
        %653 = vmatpush1.bf16.msra.mxu0 0
        %654 = vmatprep.subr.bf16.mxu0 0
        %655 = vmatpush1.bf16.msra.mxu0 0
        %656 = vmatprep.subr.bf16.mxu0 0
        %657 = vmatpush1.bf16.msra.mxu0 0
        %658 = vmatprep.subr.bf16.mxu0 0
        %659 = vmatpush1.bf16.msra.mxu0 0
        %660 = vmatprep.subr.bf16.mxu0 0
        %661 = vmatpush1.bf16.msra.mxu0 0
        %662 = vmatprep.mubr.bf16.mxu0 0
        %663 = vmatmul.mubr.bf16.gmra.mrb[0].mxu0 %v565
        %v664 = vpop.f32.mrb[0].mxu0
        %v665 = vadd.f32 0.0, %v664
        %v666 = vpop.f32.mrb[0].mxu0
        %v667 = vpop.f32.mrb[0].mxu0
        %v668 = vadd.f32 0.0, %v667
        %v669 = vpop.f32.mrb[0].mxu0
        %670 = vdwg.mxu0
        %v671 = vadd.f32 %v563, %v665
        %v672 = vadd.f32 %v564, %v668
        %673 = vst [vmem:[#allocation2] sm:$0xff] %v671
        %674 = vst [vmem:[#allocation2 + $0x8] sm:$0xff] %v672
        %p675 = scmp.eq.s32.totalorder %s28, 10
        // Predicated region
        $region57: #{tpu_custom_call.1} parent=35 // pred_check
          %p676 = pneg %p675
        $region58: #{tpu_custom_call.1} parent=35 // pred_check_branch
          %678 = sbr.rel (%p676) target = $region60
        $region59: #{tpu_custom_call.1} parent=35 // pred_region
          %v679 = vld [vmem:[#allocation2] sm:$0xff]
          %v680 = vld [vmem:[#allocation2 + $0x8] sm:$0xff]
          %681 = vst [vmem:[#allocation11] sm:$0xff] %v679
          %682 = vst [vmem:[#allocation11 + $0x8] sm:$0xff] %v680
        $region60: #{tpu_custom_call.1} parent=35 // pred_fallthru
          _
        // Predicated region
        $region61: #{tpu_custom_call.1} parent=35 // pred_check
          %p683 = pneg %p157
        $region62: #{tpu_custom_call.1} parent=35 // pred_check_branch
          %685 = sbr.rel (%p683) target = $region64
        $region63: #{tpu_custom_call.1} parent=35 // pred_region
          %s686 = smul.u32 2, %s27
          %s688 = ssub.s32 256, 256
          %689 = vsyncadd [#allocation5], %s688
          %s690 = smul.addr %s686, 128
          %s691 = scalar_lea.hbm %s4, %s690
          %s692 = sshll.u32 [#allocation11], 4
          %s693 = int_to_ptr.vmem [resolvable:$true] %s692
          %698 = dma.vmem_to_hbm [thread:$0]  %s693, 256, %s691, [#allocation5], 128, 128, 8
        $region64: #{tpu_custom_call.1} parent=35 // pred_fallthru
          _
        // Predicated region
        $region65: #{tpu_custom_call.1} parent=35 // pred_check
          %p699 = pneg %p157
        $region66: #{tpu_custom_call.1} parent=35 // pred_check_branch
          %701 = sbr.rel (%p699) target = $region68
        $region67: #{tpu_custom_call.1} parent=35 // pred_region
          %702 = dma.done [#allocation5], 256
        $region68: #{tpu_custom_call.1} parent=35 // pred_fallthru
          _
      $region36: #{tpu_custom_call.1} parent=5 // pred_fallthru
        _
      %p703 = scmp.le.s32.totalorder 2, %s18
      // Predicated region
      $region69: #{tpu_custom_call.1} parent=5 // pred_check
        %p704 = pneg %p703
      $region70: #{tpu_custom_call.1} parent=5 // pred_check_branch
        %706 = sbr.rel (%p704) target = $region72
      $region71: #{tpu_custom_call.1} parent=5 // pred_region
        %s707 = ssub.s32 %s18, 2
      $region72: #{tpu_custom_call.1} parent=5 // pred_fallthru
        _
    $region6: #{tpu_custom_call.1} parent=1 // loop_footer
      %s22 = sadd.s32 1, %s18
    $region7: #{tpu_custom_call.1} parent=1 // loop_footer_branch
      %17 = sbr.rel target = $region3
    $region8: #{tpu_custom_call.1} parent=1 // loop_exit
      _
    %708 = vsyncpa [#allocation4], 1
    %s709 = scalar_lea.sflag [#allocation4], 1
    %710 = vsyncpa %s709, 1
    %711 = vsyncpa [#allocation7], 1
    %s712 = scalar_lea.sflag [#allocation7], 1
    %713 = vsyncpa %s712, 1
    %714 = vsyncpa [#allocation10], 1
    %s715 = scalar_lea.sflag [#allocation10], 1
    %716 = vsyncpa %s715, 1
    %717 = vsyncpa [#allocation5], 1
    %s718 = scalar_lea.sflag [#allocation5], 1
    %719 = vsyncpa %s718, 1

</llo_original>
